<compile_context>
chip_gen: v7x
topology: tpu7x:2x2x1
jax: 0.10.0
libtpu: 0.0.40
codegen_flags: <defaults>
</compile_context>

<pallas_src>
import jax
import jax.numpy as jnp
from jax import lax
from jax.experimental import pallas as pl
from jax.experimental.pallas import tpu as pltpu


def _dsconv3x3_kernel(x_ref, xt_ref, xb_ref, dw_ref, b1_ref, wpw_ref, b2_ref,
                      o_ref):
    """One (batch, row-strip) tile of the fused DSConv3x3.

    x_ref  : (1, TH, W, Cin)  core row strip of the input (auto-pipelined)
    xt_ref : (1, 1, W, Cin)   row above the strip (clamped at the top edge)
    xb_ref : (1, 1, W, Cin)   row below the strip (clamped at the bottom edge)
    dw_ref : (3, 3, Cin)      depthwise weights, BN1 scale pre-folded (f32)
    b1_ref : (1, Cin)         BN1 bias (f32)
    wpw_ref: (Cin, Cout)      pointwise weights, BN2 scale pre-folded
    b2_ref : (1, Cout)        BN2 bias (f32)
    o_ref  : (1, TH, W, Cout) output row strip
    """
    h = pl.program_id(1)
    n_strips = pl.num_programs(1)

    TH = x_ref.shape[1]
    W = x_ref.shape[2]
    Cin = x_ref.shape[3]
    Cout = o_ref.shape[3]
    f32 = jnp.float32

    x = x_ref[0].astype(f32)                                   # (TH, W, Cin)
    # Halo rows: at the image boundary the clamped fetch brings in a real row,
    # which we zero with a scalar mask (conv zero-padding semantics).
    top = xt_ref[0, 0].astype(f32) * (h > 0).astype(f32)       # (W, Cin)
    bot = xb_ref[0, 0].astype(f32) * (h < n_strips - 1).astype(f32)

    # Strip with its one-row halo on each side.
    xp = jnp.concatenate([top[None], x, bot[None]], axis=0)    # (TH+2, W, Cin)
    x_t = xp[0:TH]            # image rows r-1
    x_m = xp[1:TH + 1]        # image rows r
    x_b = xp[2:TH + 2]        # image rows r+1

    dw = dw_ref[...].astype(f32)                               # (3, 3, Cin)

    # ---------------- depthwise 3x3 (VPU, f32 accumulation) ------------------
    # Center column (kw == 1): no W shift needed.
    acc = x_t * dw[0, 1] + x_m * dw[1, 1] + x_b * dw[2, 1]

    if W > 1:
        # West / east neighbour contributions, shifted along W by +/-1 with a
        # zero column at the image edge.  Explicit slice+concat keeps the
        # semantics unambiguous and lowers to cheap sublane shuffles.
        zcol = jnp.zeros((TH, 1, Cin), f32)
        c_w = x_t * dw[0, 0] + x_m * dw[1, 0] + x_b * dw[2, 0]
        c_e = x_t * dw[0, 2] + x_m * dw[1, 2] + x_b * dw[2, 2]
        acc = acc + jnp.concatenate([zcol, c_w[:, :W - 1]], axis=1)
        acc = acc + jnp.concatenate([c_e[:, 1:], zcol], axis=1)

    # BN1 bias + ReLU (BN1 scale already folded into dw).
    y = jnp.maximum(acc + b1_ref[0], 0.0)

    # ---------------- pointwise 1x1 conv (MXU) + BN2 bias + ReLU -------------
    # Reshape (TH, W, Cin) -> (TH*W, Cin) only merges leading dims (cheap).
    y2 = jnp.dot(y.reshape(TH * W, Cin).astype(wpw_ref.dtype), wpw_ref[...],
                 preferred_element_type=jnp.float32)
    y2 = jnp.maximum(y2 + b2_ref[0], 0.0)
    o_ref[0] = y2.reshape(TH, W, Cout).astype(o_ref.dtype)


def _fold_bn(gamma, beta, mean, var, eps=1e-5):
    scale = gamma / jnp.sqrt(var + eps)
    bias = beta - mean * scale
    return scale, bias


def _pick_row_tile(H, W, cin, cout, in_itemsize, out_itemsize,
                   max_rows=64, vmem_budget_bytes=8 << 20):
    """Largest divisor of H that is <= max_rows and whose per-strip VMEM
    working set (double-buffered strips + f32 temporaries) fits the budget."""
    best = 1
    for th in range(1, min(H, max_rows) + 1):
        if H % th:
            continue
        need = (2 * th * W * cin * in_itemsize        # core strip (x2 buffers)
                + 4 * W * cin * in_itemsize           # halo rows (x2 buffers)
                + 2 * th * W * cout * out_itemsize    # output strip (x2)
                + (8 * th * W * cin + 2 * th * W * cout) * 4)  # f32 temporaries
        if need <= vmem_budget_bytes:
            best = th
    return best


def dsconv3x3(x, dw_w, bn1, pw_w, bn2, *, eps=1e-5, max_rows=64,
              mxu_dtype=jnp.bfloat16, data_format="NCHW"):
    """DSConv3x3 forward (stride=1, dilation=1, relu=True).

    x      : (N, Cin, H, W) if data_format == "NCHW" (PyTorch layout), else
             (N, H, W, Cin).
    dw_w   : (Cin, 1, 3, 3)    depthwise conv weight (PyTorch layout)
    bn1    : (gamma, beta, running_mean, running_var), each (Cin,)
    pw_w   : (Cout, Cin, 1, 1) pointwise conv weight (PyTorch layout)
    bn2    : (gamma, beta, running_mean, running_var), each (Cout,)
    mxu_dtype : dtype fed to the 1x1-conv matmul (bf16 by default; accumulation
             is always f32 via preferred_element_type).
    """
    if data_format == "NCHW":
        x_nhwc = jnp.transpose(x, (0, 2, 3, 1))
    else:
        x_nhwc = x

    N, H, W, Cin = x_nhwc.shape
    Cout = pw_w.shape[0]
    out_dtype = x_nhwc.dtype

    # Fold BN scales into the conv weights (one-off O(Cin*Cout) work); only the
    # biases remain to be applied inside the kernel.
    s1, b1 = _fold_bn(*bn1, eps=eps)
    s2, b2 = _fold_bn(*bn2, eps=eps)
    dw = (jnp.transpose(dw_w[:, 0, :, :], (1, 2, 0)) * s1).astype(jnp.float32)       # (3,3,Cin)
    wpw = (jnp.transpose(pw_w[:, :, 0, 0], (1, 0)) * s2[None, :]).astype(mxu_dtype)  # (Cin,Cout)
    b1 = b1.reshape(1, Cin).astype(jnp.float32)
    b2 = b2.reshape(1, Cout).astype(jnp.float32)

    in_isz = jnp.dtype(x_nhwc.dtype).itemsize
    out_isz = jnp.dtype(out_dtype).itemsize
    TH = _pick_row_tile(H, W, Cin, Cout, in_isz, out_isz, max_rows=max_rows)
    n_strips = H // TH

    # Explicit VMEM budget with headroom for compiler temporaries; well inside
    # v7x's 64 MiB per TensorCore.
    need = (2 * TH * W * Cin * in_isz + 4 * W * Cin * in_isz
            + 2 * TH * W * Cout * out_isz
            + (8 * TH * W * Cin + 2 * TH * W * Cout) * 4
            + dw.size * 4 + wpw.size * jnp.dtype(mxu_dtype).itemsize
            + (Cin + Cout) * 4)
    vmem_limit = int(min(48 << 20, max(16 << 20, 4 * need)))

    flops = 2 * N * H * W * Cin * Cout + 18 * N * H * W * Cin
    bytes_accessed = (N * (H + 2 * n_strips) * W * Cin * in_isz
                      + N * H * W * Cout * out_isz
                      + dw.size * 4
                      + wpw.size * jnp.dtype(mxu_dtype).itemsize
                      + (Cin + Cout) * 4)

    core_spec = pl.BlockSpec((1, TH, W, Cin), lambda n, h: (n, h, 0, 0))
    # Halo rows: block size 1 along H, so the index_map returns the row index
    # directly; clamp at the image edges (the kernel zeroes the clamped rows).
    top_spec = pl.BlockSpec(
        (1, 1, W, Cin), lambda n, h: (n, jnp.maximum(h * TH - 1, 0), 0, 0))
    bot_spec = pl.BlockSpec(
        (1, 1, W, Cin), lambda n, h: (n, jnp.minimum(h * TH + TH, H - 1), 0, 0))

    out_nhwc = pl.pallas_call(
        _dsconv3x3_kernel,
        out_shape=jax.ShapeDtypeStruct((N, H, W, Cout), out_dtype),
        grid=(N, n_strips),
        in_specs=[
            core_spec,                                        # x (core strip)
            top_spec,                                         # x (top halo row)
            bot_spec,                                         # x (bottom halo row)
            pl.BlockSpec((3, 3, Cin), lambda n, h: (0, 0, 0)),
            pl.BlockSpec((1, Cin), lambda n, h: (0, 0)),
            pl.BlockSpec((Cin, Cout), lambda n, h: (0, 0)),
            pl.BlockSpec((1, Cout), lambda n, h: (0, 0)),
        ],
        out_specs=pl.BlockSpec((1, TH, W, Cout), lambda n, h: (n, h, 0, 0)),
        compiler_params=pltpu.CompilerParams(
            dimension_semantics=("parallel", "parallel"),
            vmem_limit_bytes=vmem_limit),
        cost_estimate=pl.CostEstimate(flops=int(flops), transcendentals=0,
                                      bytes_accessed=int(bytes_accessed)),
    )(x_nhwc, x_nhwc, x_nhwc, dw, b1, wpw, b2)

    if data_format == "NCHW":
        return jnp.transpose(out_nhwc, (0, 3, 1, 2))
    return out_nhwc


def _reference(x_nchw, dw_w, bn1, pw_w, bn2, eps=1e-5):
    """Pure-JAX reference using lax.conv_general_dilated (NCHW, like PyTorch)."""
    Cin = x_nchw.shape[1]
    y = lax.conv_general_dilated(
        x_nchw, dw_w, window_strides=(1, 1), padding=((1, 1), (1, 1)),
        rhs_dilation=(1, 1), feature_group_count=Cin,
        dimension_numbers=("NCHW", "OIHW", "NCHW"))
    s1, b1 = _fold_bn(*bn1, eps=eps)
    y = jnp.maximum(y * s1[None, :, None, None] + b1[None, :, None, None], 0.0)
    y = lax.conv_general_dilated(
        y, pw_w, window_strides=(1, 1), padding=((0, 0), (0, 0)),
        dimension_numbers=("NCHW", "OIHW", "NCHW"))
    s2, b2 = _fold_bn(*bn2, eps=eps)
    return jnp.maximum(y * s2[None, :, None, None] + b2[None, :, None, None], 0.0)


if __name__ == "__main__":
    key = jax.random.PRNGKey(0)
    N, Cin, Cout, H, W = 2, 4, 8, 16, 16
    k = jax.random.split(key, 10)

    x = jax.random.normal(k[0], (N, Cin, H, W), jnp.float32)

    # Depthwise conv weight (Cin, 1, 3, 3), no bias (bias=False in convbnrelu).
    dw_w = jax.random.normal(k[1], (Cin, 1, 3, 3), jnp.float32) * 0.3
    # BatchNorm2d(Cin) — deterministic, non-trivial eval-mode stats.
    bn1 = (jax.random.normal(k[2], (Cin,), jnp.float32) * 0.1 + 1.0,     # gamma
           jax.random.normal(k[3], (Cin,), jnp.float32) * 0.1,            # beta
           jax.random.normal(k[4], (Cin,), jnp.float32) * 0.1,            # running_mean
           jnp.abs(jax.random.normal(k[5], (Cin,), jnp.float32)) + 0.5)   # running_var
    # Pointwise conv weight (Cout, Cin, 1, 1), no bias.
    pw_w = jax.random.normal(k[6], (Cout, Cin, 1, 1), jnp.float32) * 0.3
    bn2 = (jax.random.normal(k[7], (Cout,), jnp.float32) * 0.1 + 1.0,
           jax.random.normal(k[8], (Cout,), jnp.float32) * 0.1,
           jax.random.normal(k[9], (Cout,), jnp.float32) * 0.1,
           jnp.abs(jax.random.normal(k[0], (Cout,), jnp.float32)) + 0.5)

    ref = jax.block_until_ready(_reference(x, dw_w, bn1, pw_w, bn2))

    # (1) f32 MXU path with small row strips (exercises the halo rows and the
    #     top/bottom boundary handling across 4 strips).
    out_f32 = jax.block_until_ready(
        dsconv3x3(x, dw_w, bn1, pw_w, bn2, mxu_dtype=jnp.float32, max_rows=4))
    assert out_f32.shape == (N, Cout, H, W)
    assert jnp.allclose(out_f32, ref, atol=5e-3, rtol=5e-3), "f32 kernel mismatch"

    # (2) default performance path: bf16 inputs on the MXU (f32 accumulation),
    #     default row tiling (single strip here); looser tolerance for bf16.
    out_bf16 = jax.block_until_ready(dsconv3x3(x, dw_w, bn1, pw_w, bn2))
    assert out_bf16.shape == (N, Cout, H, W)
    assert jnp.allclose(out_bf16, ref, atol=1e-1, rtol=1e-1), "bf16 kernel mismatch"

    print("KERNEL_OK")
</pallas_src>

<mosaic_0001>
module attributes {stable_mosaic.version = 11 : i64} {
  func.func @_dsconv3x3_kernel(%arg0: i32, %arg1: i32, %arg2: memref<1x4x16x4xf32, #tpu.memory_space<vmem>>, %arg3: memref<1x1x16x4xf32, #tpu.memory_space<vmem>>, %arg4: memref<1x1x16x4xf32, #tpu.memory_space<vmem>>, %arg5: memref<3x3x4xf32, #tpu.memory_space<vmem>>, %arg6: memref<1x4xf32, #tpu.memory_space<vmem>>, %arg7: memref<4x8xf32, #tpu.memory_space<vmem>>, %arg8: memref<1x8xf32, #tpu.memory_space<vmem>>, %arg9: memref<1x4x16x8xf32, #tpu.memory_space<vmem>>) attributes {dimension_semantics = [#tpu.dimension_semantics<parallel>, #tpu.dimension_semantics<parallel>], iteration_bounds = array<i64: 2, 4>, scalar_prefetch = 0 : i64, scratch_operands = 0 : i64, tpu.core_type = #tpu.core_type<tc>, window_params = [{transform_indices = @transform_0, window_bounds = array<i64: 1, 4, 16, 4>}, {transform_indices = @transform_1, window_bounds = array<i64: 1, 1, 16, 4>}, {transform_indices = @transform_2, window_bounds = array<i64: 1, 1, 16, 4>}, {pipeline_mode = #tpu.pipeline_mode<synchronous>, transform_indices = @transform_3, window_bounds = array<i64: 3, 3, 4>}, {pipeline_mode = #tpu.pipeline_mode<synchronous>, transform_indices = @transform_4, window_bounds = array<i64: 1, 4>}, {pipeline_mode = #tpu.pipeline_mode<synchronous>, transform_indices = @transform_5, window_bounds = array<i64: 4, 8>}, {pipeline_mode = #tpu.pipeline_mode<synchronous>, transform_indices = @transform_6, window_bounds = array<i64: 1, 8>}, {transform_indices = @transform_7, window_bounds = array<i64: 1, 4, 16, 8>}]} {
    %c0 = arith.constant 0 : index
    %c0_0 = arith.constant 0 : index
    %c0_1 = arith.constant 0 : index
    %c0_2 = arith.constant 0 : index
    %0 = vector.load %arg2[%c0, %c0_0, %c0_1, %c0_2] : memref<1x4x16x4xf32, #tpu.memory_space<vmem>>, vector<1x4x16x4xf32>
    %1 = vector.shape_cast %0 : vector<1x4x16x4xf32> to vector<4x16x4xf32>
    %c0_3 = arith.constant 0 : index
    %c0_4 = arith.constant 0 : index
    %c0_5 = arith.constant 0 : index
    %c0_6 = arith.constant 0 : index
    %2 = vector.load %arg3[%c0_3, %c0_4, %c0_5, %c0_6] : memref<1x1x16x4xf32, #tpu.memory_space<vmem>>, vector<1x1x16x4xf32>
    %3 = vector.shape_cast %2 : vector<1x1x16x4xf32> to vector<16x4xf32>
    %c0_i32 = arith.constant 0 : i32
    %4 = arith.cmpi sgt, %arg1, %c0_i32 : i32
    %5 = arith.extui %4 : i1 to i32
    %6 = arith.sitofp %5 : i32 to f32
    %7 = vector.broadcast %6 : f32 to vector<16x4xf32>
    %8 = arith.mulf %3, %7 : vector<16x4xf32>
    %c0_7 = arith.constant 0 : index
    %c0_8 = arith.constant 0 : index
    %c0_9 = arith.constant 0 : index
    %c0_10 = arith.constant 0 : index
    %9 = vector.load %arg4[%c0_7, %c0_8, %c0_9, %c0_10] : memref<1x1x16x4xf32, #tpu.memory_space<vmem>>, vector<1x1x16x4xf32>
    %10 = vector.shape_cast %9 : vector<1x1x16x4xf32> to vector<16x4xf32>
    %c3_i32 = arith.constant 3 : i32
    %11 = arith.cmpi slt, %arg1, %c3_i32 : i32
    %12 = arith.extui %11 : i1 to i32
    %13 = arith.sitofp %12 : i32 to f32
    %14 = vector.broadcast %13 : f32 to vector<16x4xf32>
    %15 = arith.mulf %10, %14 : vector<16x4xf32>
    %16 = vector.shape_cast %8 : vector<16x4xf32> to vector<1x16x4xf32>
    %17 = vector.shape_cast %15 : vector<16x4xf32> to vector<1x16x4xf32>
    %18 = tpu.concatenate %16, %1, %17 in 0 : vector<1x16x4xf32>, vector<4x16x4xf32>, vector<1x16x4xf32> -> vector<6x16x4xf32>
    %19 = vector.extract_strided_slice %18 {offsets = [0, 0, 0], sizes = [4, 16, 4], strides = [1, 1, 1]} : vector<6x16x4xf32> to vector<4x16x4xf32>
    %20 = vector.extract_strided_slice %18 {offsets = [1, 0, 0], sizes = [4, 16, 4], strides = [1, 1, 1]} : vector<6x16x4xf32> to vector<4x16x4xf32>
    %21 = vector.extract_strided_slice %18 {offsets = [2, 0, 0], sizes = [4, 16, 4], strides = [1, 1, 1]} : vector<6x16x4xf32> to vector<4x16x4xf32>
    %c0_11 = arith.constant 0 : index
    %c0_12 = arith.constant 0 : index
    %c0_13 = arith.constant 0 : index
    %22 = vector.load %arg5[%c0_11, %c0_12, %c0_13] : memref<3x3x4xf32, #tpu.memory_space<vmem>>, vector<3x3x4xf32>
    %23 = vector.extract_strided_slice %22 {offsets = [0, 1, 0], sizes = [1, 1, 4], strides = [1, 1, 1]} : vector<3x3x4xf32> to vector<1x1x4xf32>
    %24 = vector.shape_cast %23 : vector<1x1x4xf32> to vector<4xf32>
    %25 = vector.shape_cast %24 : vector<4xf32> to vector<1x1x4xf32>
    %26 = vector.broadcast %25 : vector<1x1x4xf32> to vector<4x16x4xf32>
    %27 = arith.mulf %19, %26 : vector<4x16x4xf32>
    %28 = vector.extract_strided_slice %22 {offsets = [1, 1, 0], sizes = [1, 1, 4], strides = [1, 1, 1]} : vector<3x3x4xf32> to vector<1x1x4xf32>
    %29 = vector.shape_cast %28 : vector<1x1x4xf32> to vector<4xf32>
    %30 = vector.shape_cast %29 : vector<4xf32> to vector<1x1x4xf32>
    %31 = vector.broadcast %30 : vector<1x1x4xf32> to vector<4x16x4xf32>
    %32 = arith.mulf %20, %31 : vector<4x16x4xf32>
    %33 = arith.addf %27, %32 : vector<4x16x4xf32>
    %34 = vector.extract_strided_slice %22 {offsets = [2, 1, 0], sizes = [1, 1, 4], strides = [1, 1, 1]} : vector<3x3x4xf32> to vector<1x1x4xf32>
    %35 = vector.shape_cast %34 : vector<1x1x4xf32> to vector<4xf32>
    %36 = vector.shape_cast %35 : vector<4xf32> to vector<1x1x4xf32>
    %37 = vector.broadcast %36 : vector<1x1x4xf32> to vector<4x16x4xf32>
    %38 = arith.mulf %21, %37 : vector<4x16x4xf32>
    %39 = arith.addf %33, %38 : vector<4x16x4xf32>
    %cst = arith.constant 0.000000e+00 : f32
    %40 = vector.broadcast %cst : f32 to vector<4x1x4xf32>
    %41 = vector.extract_strided_slice %22 {offsets = [0, 0, 0], sizes = [1, 1, 4], strides = [1, 1, 1]} : vector<3x3x4xf32> to vector<1x1x4xf32>
    %42 = vector.shape_cast %41 : vector<1x1x4xf32> to vector<4xf32>
    %43 = vector.shape_cast %42 : vector<4xf32> to vector<1x1x4xf32>
    %44 = vector.broadcast %43 : vector<1x1x4xf32> to vector<4x16x4xf32>
    %45 = arith.mulf %19, %44 : vector<4x16x4xf32>
    %46 = vector.extract_strided_slice %22 {offsets = [1, 0, 0], sizes = [1, 1, 4], strides = [1, 1, 1]} : vector<3x3x4xf32> to vector<1x1x4xf32>
    %47 = vector.shape_cast %46 : vector<1x1x4xf32> to vector<4xf32>
    %48 = vector.shape_cast %47 : vector<4xf32> to vector<1x1x4xf32>
    %49 = vector.broadcast %48 : vector<1x1x4xf32> to vector<4x16x4xf32>
    %50 = arith.mulf %20, %49 : vector<4x16x4xf32>
    %51 = arith.addf %45, %50 : vector<4x16x4xf32>
    %52 = vector.extract_strided_slice %22 {offsets = [2, 0, 0], sizes = [1, 1, 4], strides = [1, 1, 1]} : vector<3x3x4xf32> to vector<1x1x4xf32>
    %53 = vector.shape_cast %52 : vector<1x1x4xf32> to vector<4xf32>
    %54 = vector.shape_cast %53 : vector<4xf32> to vector<1x1x4xf32>
    %55 = vector.broadcast %54 : vector<1x1x4xf32> to vector<4x16x4xf32>
    %56 = arith.mulf %21, %55 : vector<4x16x4xf32>
    %57 = arith.addf %51, %56 : vector<4x16x4xf32>
    %58 = vector.extract_strided_slice %22 {offsets = [0, 2, 0], sizes = [1, 1, 4], strides = [1, 1, 1]} : vector<3x3x4xf32> to vector<1x1x4xf32>
    %59 = vector.shape_cast %58 : vector<1x1x4xf32> to vector<4xf32>
    %60 = vector.shape_cast %59 : vector<4xf32> to vector<1x1x4xf32>
    %61 = vector.broadcast %60 : vector<1x1x4xf32> to vector<4x16x4xf32>
    %62 = arith.mulf %19, %61 : vector<4x16x4xf32>
    %63 = vector.extract_strided_slice %22 {offsets = [1, 2, 0], sizes = [1, 1, 4], strides = [1, 1, 1]} : vector<3x3x4xf32> to vector<1x1x4xf32>
    %64 = vector.shape_cast %63 : vector<1x1x4xf32> to vector<4xf32>
    %65 = vector.shape_cast %64 : vector<4xf32> to vector<1x1x4xf32>
    %66 = vector.broadcast %65 : vector<1x1x4xf32> to vector<4x16x4xf32>
    %67 = arith.mulf %20, %66 : vector<4x16x4xf32>
    %68 = arith.addf %62, %67 : vector<4x16x4xf32>
    %69 = vector.extract_strided_slice %22 {offsets = [2, 2, 0], sizes = [1, 1, 4], strides = [1, 1, 1]} : vector<3x3x4xf32> to vector<1x1x4xf32>
    %70 = vector.shape_cast %69 : vector<1x1x4xf32> to vector<4xf32>
    %71 = vector.shape_cast %70 : vector<4xf32> to vector<1x1x4xf32>
    %72 = vector.broadcast %71 : vector<1x1x4xf32> to vector<4x16x4xf32>
    %73 = arith.mulf %21, %72 : vector<4x16x4xf32>
    %74 = arith.addf %68, %73 : vector<4x16x4xf32>
    %75 = vector.extract_strided_slice %57 {offsets = [0, 0, 0], sizes = [4, 15, 4], strides = [1, 1, 1]} : vector<4x16x4xf32> to vector<4x15x4xf32>
    %76 = tpu.concatenate %40, %75 in 1 : vector<4x1x4xf32>, vector<4x15x4xf32> -> vector<4x16x4xf32>
    %77 = arith.addf %39, %76 : vector<4x16x4xf32>
    %78 = vector.extract_strided_slice %74 {offsets = [0, 1, 0], sizes = [4, 15, 4], strides = [1, 1, 1]} : vector<4x16x4xf32> to vector<4x15x4xf32>
    %79 = tpu.concatenate %78, %40 in 1 : vector<4x15x4xf32>, vector<4x1x4xf32> -> vector<4x16x4xf32>
    %80 = arith.addf %77, %79 : vector<4x16x4xf32>
    %c0_14 = arith.constant 0 : index
    %c0_15 = arith.constant 0 : index
    %81 = vector.load %arg6[%c0_14, %c0_15] : memref<1x4xf32, #tpu.memory_space<vmem>>, vector<1x4xf32>
    %82 = vector.shape_cast %81 : vector<1x4xf32> to vector<4xf32>
    %83 = vector.shape_cast %82 : vector<4xf32> to vector<1x1x4xf32>
    %84 = vector.broadcast %83 : vector<1x1x4xf32> to vector<4x16x4xf32>
    %85 = arith.addf %80, %84 : vector<4x16x4xf32>
    %cst_16 = arith.constant 0.000000e+00 : f32
    %86 = vector.broadcast %cst_16 : f32 to vector<4x16x4xf32>
    %87 = arith.maximumf %85, %86 : vector<4x16x4xf32>
    %88 = vector.shape_cast %87 : vector<4x16x4xf32> to vector<64x4xf32>
    %c0_17 = arith.constant 0 : index
    %c0_18 = arith.constant 0 : index
    %89 = vector.load %arg7[%c0_17, %c0_18] : memref<4x8xf32, #tpu.memory_space<vmem>>, vector<4x8xf32>
    %cst_19 = arith.constant dense<0.000000e+00> : vector<64x8xf32>
    %90 = tpu.matmul %88, %89, %cst_19 {dimension_numbers = #tpu.dot_dimension_numbers<[1], [0], [0], [1], [0, 0, 1, 1], [], []>} : vector<64x4xf32>, vector<4x8xf32>, vector<64x8xf32> -> vector<64x8xf32>
    %c0_20 = arith.constant 0 : index
    %c0_21 = arith.constant 0 : index
    %91 = vector.load %arg8[%c0_20, %c0_21] : memref<1x8xf32, #tpu.memory_space<vmem>>, vector<1x8xf32>
    %92 = vector.shape_cast %91 : vector<1x8xf32> to vector<8xf32>
    %93 = vector.shape_cast %92 : vector<8xf32> to vector<1x8xf32>
    %94 = vector.broadcast %93 : vector<1x8xf32> to vector<64x8xf32>
    %95 = arith.addf %90, %94 : vector<64x8xf32>
    %cst_22 = arith.constant 0.000000e+00 : f32
    %96 = vector.broadcast %cst_22 : f32 to vector<64x8xf32>
    %97 = arith.maximumf %95, %96 : vector<64x8xf32>
    %98 = vector.shape_cast %97 : vector<64x8xf32> to vector<4x16x8xf32>
    %c0_23 = arith.constant 0 : index
    %c0_24 = arith.constant 0 : index
    %c0_25 = arith.constant 0 : index
    %c0_26 = arith.constant 0 : index
    %99 = vector.load %arg9[%c0_23, %c0_24, %c0_25, %c0_26] : memref<1x4x16x8xf32, #tpu.memory_space<vmem>>, vector<1x4x16x8xf32>
    %100 = vector.shape_cast %99 : vector<1x4x16x8xf32> to vector<4x16x8xf32>
    %101 = vector.shape_cast %98 : vector<4x16x8xf32> to vector<1x4x16x8xf32>
    tpu.vector_store %arg9[%c0_23, %c0_24, %c0_25, %c0_26], %101 {strides = array<i32>} : memref<1x4x16x8xf32, #tpu.memory_space<vmem>>, vector<1x4x16x8xf32>,
    return
  }
  func.func @transform_0(%arg0: i32, %arg1: i32) -> (i32, i32, i32, i32) {
    %c0_i32 = arith.constant 0 : i32
    %c0_i32_0 = arith.constant 0 : i32
    %c0_i32_1 = arith.constant 0 : i32
    return %arg0, %arg1, %c0_i32, %c0_i32_0 : i32, i32, i32, i32
  }
  func.func @transform_1(%arg0: i32, %arg1: i32) -> (i32, i32, i32, i32) {
    %c4_i32 = arith.constant 4 : i32
    %0 = arith.muli %arg1, %c4_i32 : i32
    %c1_i32 = arith.constant 1 : i32
    %1 = arith.subi %0, %c1_i32 : i32
    %c0_i32 = arith.constant 0 : i32
    %2 = arith.maxsi %1, %c0_i32 : i32
    %c0_i32_0 = arith.constant 0 : i32
    %c0_i32_1 = arith.constant 0 : i32
    %c0_i32_2 = arith.constant 0 : i32
    return %arg0, %2, %c0_i32_0, %c0_i32_1 : i32, i32, i32, i32
  }
  func.func @transform_2(%arg0: i32, %arg1: i32) -> (i32, i32, i32, i32) {
    %c4_i32 = arith.constant 4 : i32
    %0 = arith.muli %arg1, %c4_i32 : i32
    %c4_i32_0 = arith.constant 4 : i32
    %1 = arith.addi %0, %c4_i32_0 : i32
    %c15_i32 = arith.constant 15 : i32
    %2 = arith.minsi %1, %c15_i32 : i32
    %c0_i32 = arith.constant 0 : i32
    %c0_i32_1 = arith.constant 0 : i32
    %c0_i32_2 = arith.constant 0 : i32
    return %arg0, %2, %c0_i32, %c0_i32_1 : i32, i32, i32, i32
  }
  func.func @transform_3(%arg0: i32, %arg1: i32) -> (i32, i32, i32) {
    %c0_i32 = arith.constant 0 : i32
    %c0_i32_0 = arith.constant 0 : i32
    %c0_i32_1 = arith.constant 0 : i32
    %c0_i32_2 = arith.constant 0 : i32
    return %c0_i32, %c0_i32_0, %c0_i32_1 : i32, i32, i32
  }
  func.func @transform_4(%arg0: i32, %arg1: i32) -> (i32, i32) {
    %c0_i32 = arith.constant 0 : i32
    %c0_i32_0 = arith.constant 0 : i32
    %c0_i32_1 = arith.constant 0 : i32
    return %c0_i32, %c0_i32_0 : i32, i32
  }
  func.func @transform_5(%arg0: i32, %arg1: i32) -> (i32, i32) {
    %c0_i32 = arith.constant 0 : i32
    %c0_i32_0 = arith.constant 0 : i32
    %c0_i32_1 = arith.constant 0 : i32
    return %c0_i32, %c0_i32_0 : i32, i32
  }
  func.func @transform_6(%arg0: i32, %arg1: i32) -> (i32, i32) {
    %c0_i32 = arith.constant 0 : i32
    %c0_i32_0 = arith.constant 0 : i32
    %c0_i32_1 = arith.constant 0 : i32
    return %c0_i32, %c0_i32_0 : i32, i32
  }
  func.func @transform_7(%arg0: i32, %arg1: i32) -> (i32, i32, i32, i32) {
    %c0_i32 = arith.constant 0 : i32
    %c0_i32_0 = arith.constant 0 : i32
    %c0_i32_1 = arith.constant 0 : i32
    return %arg0, %arg1, %c0_i32, %c0_i32_0 : i32, i32, i32, i32
  }
}

</mosaic_0001>

<llo_original>
// kernel: tpu_custom_call.1
$region0: #{tpu_custom_call.1}
  #allocation0 [shape = 'u32[]', space=smem, size = 0x4, offset = 0x4, fixed_abs, tag = 'smem constant byte address 0x4 - core index']
  #allocation1 [shape = 'u32[144,128]{1,0:T(1,128)}', space=vmem, size = 0x12000, scoped, tag = 'internal scratch']
  %s0 = inlined_call_operand.vmem [shape: f32[2,16,16,4], index: 0, kind: input, shape index: {}]
  %s1 = inlined_call_operand.vmem [shape: f32[2,16,16,4], index: 1, kind: input, shape index: {}]
  %s2 = inlined_call_operand.vmem [shape: f32[2,16,16,4], index: 2, kind: input, shape index: {}]
  %s3 = inlined_call_operand.vmem [shape: f32[3,3,4], index: 3, kind: input, shape index: {}]
  %s4 = inlined_call_operand.vmem [shape: f32[1,4], index: 4, kind: input, shape index: {}]
  %s5 = inlined_call_operand.vmem [shape: f32[4,8], index: 5, kind: input, shape index: {}]
  %s6 = inlined_call_operand.vmem [shape: f32[1,8], index: 6, kind: input, shape index: {}]
  %s7 = inlined_call_operand.vmem [shape: f32[2,16,16,8], index: 7, kind: output, shape index: {}]
  %s8 = sld [smem:[#allocation0]]
  $region61: #{tpu_custom_call.1} parent=0
    _
  %s10 = ssub.s32 1, %s8
  %s11 = scalar_select 0, %s10, %s8
  loop: start=0, step=1, limit=10
  $region2: #{tpu_custom_call.1} parent=0 // loop_pre_header
    _
  $region3: #{tpu_custom_call.1} parent=0 // loop_header
    %s13 = sphi 0, %s17
    %p14 = scmp.ge.s32.totalorder %s13, 10
    %s20 = sphi 0, %s32
    %s21 = sphi 0, %s28
    %s22 = sphi 0, %s20
    %s23 = sphi 0, %s21
    %s24 = sphi 0, %s22
    %s25 = sphi 0, %s23
    %s37 = sphi 0, %s39
    %s40 = sphi 0, %s37
    %s41 = sphi 0, %s40
    %s57 = sphi 0, %s41
    %s73 = sphi 0, %s75
    %s76 = sphi 0, %s73
    %s77 = sphi 0, %s76
    %s93 = sphi 0, %s77
    %s109 = sphi 0, %s111
    %s112 = sphi 0, %s109
    %s113 = sphi 0, %s112
    %s129 = sphi 0, %s113
    %s133 = sphi 0, %s133
    %s135 = sphi 0, %s133
    %s136 = sphi 0, %s135
    %s150 = sphi 0, %s136
    %s154 = sphi 0, %s154
    %s156 = sphi 0, %s154
    %s157 = sphi 0, %s156
    %s171 = sphi 0, %s157
    %s175 = sphi 0, %s175
    %s177 = sphi 0, %s175
    %s178 = sphi 0, %s177
    %s192 = sphi 0, %s178
    %s196 = sphi 0, %s196
    %s198 = sphi 0, %s196
    %s199 = sphi 0, %s198
    %s213 = sphi 0, %s199
    %s221 = sphi 0, %s223
    %s224 = sphi 0, %s221
    %s225 = sphi 0, %s224
    %s241 = sphi 0, %s225
  $region4: #{tpu_custom_call.1} parent=0 // loop_header_branch
    %16 = sbr.rel (%p14) target = $region8
  $region5: #{tpu_custom_call.1} parent=0 // loop_body
    %s18 = ssub.s32 %s13, 1
    %s19 = ssub.s32 %s13, 2
    %s26 = sadd.s32 1, %s21
    %p27 = scmp.ge.s32.totalorder %s26, 4
    %s28 = scalar_select %p27, 0, %s26
    %s29 = sadd.s32 1, %s20
    %s30 = scalar_select %p27, %s29, %s20
    %p31 = scmp.ge.s32.totalorder %s30, 2
    %s32 = scalar_select %p31, 0, %s30
    %s33 = ssub.s32 %s20, %s32
    %s34 = ssub.s32 %s21, %s28
    %s35 = sor.u32 %s33, %s34
    %p36 = scmp.eq.s32.totalorder %s35, 0
    %s38 = sadd.s32 %s37, 1
    %s39 = scalar_select %p36, %s37, %s38
    %p42 = pneg %p36
    %p43 = scmp.eq.s32.totalorder %s13, 7
    %p44 = por %p42, %p43
    %p45 = scmp.ne.s32.totalorder %s37, %s40
    %p46 = scmp.eq.s32.totalorder %s13, 0
    %p47 = por %p45, %p46
    %p48 = scmp.ne.s32.totalorder %s37, %s40
    %p49 = scmp.eq.s32.totalorder %s18, 7
    %p50 = por %p48, %p49
    %p51 = scmp.ne.s32.totalorder %s40, %s41
    %p52 = scmp.eq.s32.totalorder %s18, 0
    %p53 = por %p51, %p52
    %p54 = scmp.ne.s32.totalorder %s40, %s41
    %p55 = scmp.eq.s32.totalorder %s19, 7
    %p56 = por %p54, %p55
    %p58 = scmp.ne.s32.totalorder %s41, %s57
    %p59 = scmp.eq.s32.totalorder %s19, 0
    %p60 = por %p58, %p59
    %s61 = smul.u32 %s21, 4
    %s62 = ssub.s32 %s61, 1
    %p63 = scmp.gt.s32.totalorder %s62, 0
    %s64 = scalar_select %p63, %s62, 0
    %s65 = smul.u32 %s28, 4
    %s66 = ssub.s32 %s65, 1
    %p67 = scmp.gt.s32.totalorder %s66, 0
    %s68 = scalar_select %p67, %s66, 0
    %s69 = ssub.s32 %s20, %s32
    %s70 = ssub.s32 %s64, %s68
    %s71 = sor.u32 %s69, %s70
    %p72 = scmp.eq.s32.totalorder %s71, 0
    %s74 = sadd.s32 %s73, 1
    %s75 = scalar_select %p72, %s73, %s74
    %p78 = pneg %p72
    %p79 = scmp.eq.s32.totalorder %s13, 7
    %p80 = por %p78, %p79
    %p81 = scmp.ne.s32.totalorder %s73, %s76
    %p82 = scmp.eq.s32.totalorder %s13, 0
    %p83 = por %p81, %p82
    %p84 = scmp.ne.s32.totalorder %s73, %s76
    %p85 = scmp.eq.s32.totalorder %s18, 7
    %p86 = por %p84, %p85
    %p87 = scmp.ne.s32.totalorder %s76, %s77
    %p88 = scmp.eq.s32.totalorder %s18, 0
    %p89 = por %p87, %p88
    %p90 = scmp.ne.s32.totalorder %s76, %s77
    %p91 = scmp.eq.s32.totalorder %s19, 7
    %p92 = por %p90, %p91
    %p94 = scmp.ne.s32.totalorder %s77, %s93
    %p95 = scmp.eq.s32.totalorder %s19, 0
    %p96 = por %p94, %p95
    %s97 = smul.u32 %s21, 4
    %s98 = sadd.s32 %s97, 4
    %p99 = scmp.lt.s32.totalorder %s98, 15
    %s100 = scalar_select %p99, %s98, 15
    %s101 = smul.u32 %s28, 4
    %s102 = sadd.s32 %s101, 4
    %p103 = scmp.lt.s32.totalorder %s102, 15
    %s104 = scalar_select %p103, %s102, 15
    %s105 = ssub.s32 %s20, %s32
    %s106 = ssub.s32 %s100, %s104
    %s107 = sor.u32 %s105, %s106
    %p108 = scmp.eq.s32.totalorder %s107, 0
    %s110 = sadd.s32 %s109, 1
    %s111 = scalar_select %p108, %s109, %s110
    %p114 = pneg %p108
    %p115 = scmp.eq.s32.totalorder %s13, 7
    %p116 = por %p114, %p115
    %p117 = scmp.ne.s32.totalorder %s109, %s112
    %p118 = scmp.eq.s32.totalorder %s13, 0
    %p119 = por %p117, %p118
    %p120 = scmp.ne.s32.totalorder %s109, %s112
    %p121 = scmp.eq.s32.totalorder %s18, 7
    %p122 = por %p120, %p121
    %p123 = scmp.ne.s32.totalorder %s112, %s113
    %p124 = scmp.eq.s32.totalorder %s18, 0
    %p125 = por %p123, %p124
    %p126 = scmp.ne.s32.totalorder %s112, %s113
    %p127 = scmp.eq.s32.totalorder %s19, 7
    %p128 = por %p126, %p127
    %p130 = scmp.ne.s32.totalorder %s113, %s129
    %p131 = scmp.eq.s32.totalorder %s19, 0
    %p132 = por %p130, %p131
    %s134 = sadd.s32 %s133, 1
    %p137 = scmp.eq.s32.totalorder %s13, 7
    %p138 = scmp.ne.s32.totalorder %s133, %s135
    %p139 = scmp.eq.s32.totalorder %s13, 0
    %p140 = por %p138, %p139
    %p141 = scmp.ne.s32.totalorder %s133, %s135
    %p142 = scmp.eq.s32.totalorder %s18, 7
    %p143 = por %p141, %p142
    %p144 = scmp.ne.s32.totalorder %s135, %s136
    %p145 = scmp.eq.s32.totalorder %s18, 0
    %p146 = por %p144, %p145
    %p147 = scmp.ne.s32.totalorder %s135, %s136
    %p148 = scmp.eq.s32.totalorder %s19, 7
    %p149 = por %p147, %p148
    %p151 = scmp.ne.s32.totalorder %s136, %s150
    %p152 = scmp.eq.s32.totalorder %s19, 0
    %p153 = por %p151, %p152
    %s155 = sadd.s32 %s154, 1
    %p158 = scmp.eq.s32.totalorder %s13, 7
    %p159 = scmp.ne.s32.totalorder %s154, %s156
    %p160 = scmp.eq.s32.totalorder %s13, 0
    %p161 = por %p159, %p160
    %p162 = scmp.ne.s32.totalorder %s154, %s156
    %p163 = scmp.eq.s32.totalorder %s18, 7
    %p164 = por %p162, %p163
    %p165 = scmp.ne.s32.totalorder %s156, %s157
    %p166 = scmp.eq.s32.totalorder %s18, 0
    %p167 = por %p165, %p166
    %p168 = scmp.ne.s32.totalorder %s156, %s157
    %p169 = scmp.eq.s32.totalorder %s19, 7
    %p170 = por %p168, %p169
    %p172 = scmp.ne.s32.totalorder %s157, %s171
    %p173 = scmp.eq.s32.totalorder %s19, 0
    %p174 = por %p172, %p173
    %s176 = sadd.s32 %s175, 1
    %p179 = scmp.eq.s32.totalorder %s13, 7
    %p180 = scmp.ne.s32.totalorder %s175, %s177
    %p181 = scmp.eq.s32.totalorder %s13, 0
    %p182 = por %p180, %p181
    %p183 = scmp.ne.s32.totalorder %s175, %s177
    %p184 = scmp.eq.s32.totalorder %s18, 7
    %p185 = por %p183, %p184
    %p186 = scmp.ne.s32.totalorder %s177, %s178
    %p187 = scmp.eq.s32.totalorder %s18, 0
    %p188 = por %p186, %p187
    %p189 = scmp.ne.s32.totalorder %s177, %s178
    %p190 = scmp.eq.s32.totalorder %s19, 7
    %p191 = por %p189, %p190
    %p193 = scmp.ne.s32.totalorder %s178, %s192
    %p194 = scmp.eq.s32.totalorder %s19, 0
    %p195 = por %p193, %p194
    %s197 = sadd.s32 %s196, 1
    %p200 = scmp.eq.s32.totalorder %s13, 7
    %p201 = scmp.ne.s32.totalorder %s196, %s198
    %p202 = scmp.eq.s32.totalorder %s13, 0
    %p203 = por %p201, %p202
    %p204 = scmp.ne.s32.totalorder %s196, %s198
    %p205 = scmp.eq.s32.totalorder %s18, 7
    %p206 = por %p204, %p205
    %p207 = scmp.ne.s32.totalorder %s198, %s199
    %p208 = scmp.eq.s32.totalorder %s18, 0
    %p209 = por %p207, %p208
    %p210 = scmp.ne.s32.totalorder %s198, %s199
    %p211 = scmp.eq.s32.totalorder %s19, 7
    %p212 = por %p210, %p211
    %p214 = scmp.ne.s32.totalorder %s199, %s213
    %p215 = scmp.eq.s32.totalorder %s19, 0
    %p216 = por %p214, %p215
    %s217 = ssub.s32 %s20, %s32
    %s218 = ssub.s32 %s21, %s28
    %s219 = sor.u32 %s217, %s218
    %p220 = scmp.eq.s32.totalorder %s219, 0
    %s222 = sadd.s32 %s221, 1
    %s223 = scalar_select %p220, %s221, %s222
    %p226 = pneg %p220
    %p227 = scmp.eq.s32.totalorder %s13, 7
    %p228 = por %p226, %p227
    %p229 = scmp.ne.s32.totalorder %s221, %s224
    %p230 = scmp.eq.s32.totalorder %s13, 0
    %p231 = por %p229, %p230
    %p232 = scmp.ne.s32.totalorder %s221, %s224
    %p233 = scmp.eq.s32.totalorder %s18, 7
    %p234 = por %p232, %p233
    %p235 = scmp.ne.s32.totalorder %s224, %s225
    %p236 = scmp.eq.s32.totalorder %s18, 0
    %p237 = por %p235, %p236
    %p238 = scmp.ne.s32.totalorder %s224, %s225
    %p239 = scmp.eq.s32.totalorder %s19, 7
    %p240 = por %p238, %p239
    %p242 = scmp.ne.s32.totalorder %s225, %s241
    %p243 = scmp.eq.s32.totalorder %s19, 0
    %p244 = por %p242, %p243
    %p245 = scmp.le.s32.totalorder 1, %s13
    %p246 = scmp.lt.s32.totalorder %s13, 9
    %p247 = pnand %p245, %p246
    %p248 = pneg %p247
    // Predicated region
    $region9: #{tpu_custom_call.1} parent=5 // pred_check
      _
    $region10: #{tpu_custom_call.1} parent=5 // pred_check_branch
      %250 = sbr.rel (%p247) target = $region12
    $region11: #{tpu_custom_call.1} parent=5 // pred_region
      %s251 = ssub.s32 %s13, 1
      // Predicated region
      $region13: #{tpu_custom_call.1} parent=11 // pred_check
        %p252 = pneg %p146
      $region14: #{tpu_custom_call.1} parent=11 // pred_check_branch
        %254 = sbr.rel (%p252) target = $region16
      $region15: #{tpu_custom_call.1} parent=11 // pred_region
        _
      $region16: #{tpu_custom_call.1} parent=11 // pred_fallthru
        _
      // Predicated region
      $region17: #{tpu_custom_call.1} parent=11 // pred_check
        %p255 = pneg %p167
      $region18: #{tpu_custom_call.1} parent=11 // pred_check_branch
        %257 = sbr.rel (%p255) target = $region20
      $region19: #{tpu_custom_call.1} parent=11 // pred_region
        _
      $region20: #{tpu_custom_call.1} parent=11 // pred_fallthru
        _
      // Predicated region
      $region21: #{tpu_custom_call.1} parent=11 // pred_check
        %p258 = pneg %p188
      $region22: #{tpu_custom_call.1} parent=11 // pred_check_branch
        %260 = sbr.rel (%p258) target = $region24
      $region23: #{tpu_custom_call.1} parent=11 // pred_region
        _
      $region24: #{tpu_custom_call.1} parent=11 // pred_fallthru
        _
      // Predicated region
      $region25: #{tpu_custom_call.1} parent=11 // pred_check
        %p261 = pneg %p209
      $region26: #{tpu_custom_call.1} parent=11 // pred_check_branch
        %263 = sbr.rel (%p261) target = $region28
      $region27: #{tpu_custom_call.1} parent=11 // pred_region
        _
      $region28: #{tpu_custom_call.1} parent=11 // pred_fallthru
        _
    $region12: #{tpu_custom_call.1} parent=5 // pred_fallthru
      _
    %p264 = scmp.lt.s32.totalorder %s13, 8
    // Predicated region
    $region29: #{tpu_custom_call.1} parent=5 // pred_check
      %p265 = pneg %p264
    $region30: #{tpu_custom_call.1} parent=5 // pred_check_branch
      %267 = sbr.rel (%p265) target = $region32
    $region31: #{tpu_custom_call.1} parent=5 // pred_region
      // Predicated region
      $region33: #{tpu_custom_call.1} parent=31 // pred_check
        %p268 = pneg %p47
      $region34: #{tpu_custom_call.1} parent=31 // pred_check_branch
        %270 = sbr.rel (%p268) target = $region36
      $region35: #{tpu_custom_call.1} parent=31 // pred_region
        %s271 = smul.u32 4, %s21
        %p272 = scmp.lt.s32.totalorder %s20, 1
        %s273 = scalar_select %p272, %s20, 1
        %p274 = scmp.lt.s32.totalorder %s271, 15
        %s275 = scalar_select %p274, %s271, 15
        %s276 = smul.addr %s275, 2
        %s277 = smul.addr %s273, 32
        %s278 = sadd.s32 %s276, %s277
        %s279 = smul.addr %s278, 8
        %s280 = scalar_lea.vmem %s0, %s279
        %s281 = smul.u32 4, %s21
      $region36: #{tpu_custom_call.1} parent=31 // pred_fallthru
        _
      // Predicated region
      $region37: #{tpu_custom_call.1} parent=31 // pred_check
        %p282 = pneg %p83
      $region38: #{tpu_custom_call.1} parent=31 // pred_check_branch
        %284 = sbr.rel (%p282) target = $region40
      $region39: #{tpu_custom_call.1} parent=31 // pred_region
        %s285 = smul.u32 %s21, 4
        %s286 = ssub.s32 %s285, 1
        %p287 = scmp.gt.s32.totalorder %s286, 0
        %s288 = scalar_select %p287, %s286, 0
        %p289 = scmp.lt.s32.totalorder %s20, 1
        %s290 = scalar_select %p289, %s20, 1
        %p291 = scmp.lt.s32.totalorder %s288, 15
        %s292 = scalar_select %p291, %s288, 15
        %s293 = smul.addr %s292, 2
        %s294 = smul.addr %s290, 32
        %s295 = sadd.s32 %s293, %s294
        %s296 = smul.addr %s295, 8
        %s297 = scalar_lea.vmem %s1, %s296
        %s298 = smul.u32 %s21, 4
        %s299 = ssub.s32 %s298, 1
        %p300 = scmp.gt.s32.totalorder %s299, 0
        %s301 = scalar_select %p300, %s299, 0
      $region40: #{tpu_custom_call.1} parent=31 // pred_fallthru
        _
      // Predicated region
      $region41: #{tpu_custom_call.1} parent=31 // pred_check
        %p302 = pneg %p119
      $region42: #{tpu_custom_call.1} parent=31 // pred_check_branch
        %304 = sbr.rel (%p302) target = $region44
      $region43: #{tpu_custom_call.1} parent=31 // pred_region
        %s305 = smul.u32 %s21, 4
        %s306 = sadd.s32 %s305, 4
        %p307 = scmp.lt.s32.totalorder %s306, 15
        %s308 = scalar_select %p307, %s306, 15
        %p309 = scmp.lt.s32.totalorder %s20, 1
        %s310 = scalar_select %p309, %s20, 1
        %p311 = scmp.lt.s32.totalorder %s308, 15
        %s312 = scalar_select %p311, %s308, 15
        %s313 = smul.addr %s312, 2
        %s314 = smul.addr %s310, 32
        %s315 = sadd.s32 %s313, %s314
        %s316 = smul.addr %s315, 8
        %s317 = scalar_lea.vmem %s2, %s316
        %s318 = smul.u32 %s21, 4
        %s319 = sadd.s32 %s318, 4
        %p320 = scmp.lt.s32.totalorder %s319, 15
        %s321 = scalar_select %p320, %s319, 15
      $region44: #{tpu_custom_call.1} parent=31 // pred_fallthru
        _
    $region32: #{tpu_custom_call.1} parent=5 // pred_fallthru
      _
    %p322 = scmp.le.s32.totalorder 1, %s13
    %p323 = scmp.lt.s32.totalorder %s13, 9
    %p324 = pnand %p322, %p323
    %p325 = pneg %p324
    // Predicated region
    $region45: #{tpu_custom_call.1} parent=5 // pred_check
      _
    $region46: #{tpu_custom_call.1} parent=5 // pred_check_branch
      %327 = sbr.rel (%p324) target = $region48
    $region47: #{tpu_custom_call.1} parent=5 // pred_region
      %s328 = ssub.s32 %s13, 1
      %s329 = smul.u32 4, %s23
      %p330 = scmp.lt.s32.totalorder %s22, 1
      %s331 = scalar_select %p330, %s22, 1
      %p332 = scmp.lt.s32.totalorder %s329, 15
      %s333 = scalar_select %p332, %s329, 15
      %s334 = smul.addr %s333, 2
      %s335 = smul.addr %s331, 32
      %s336 = sadd.s32 %s334, %s335
      %s337 = smul.addr %s336, 8
      %s338 = scalar_lea.vmem %s0, %s337
      %p339 = pneg %p53
      %p340 = pneg %p50
      %s341 = smul.u32 %s23, 4
      %s342 = ssub.s32 %s341, 1
      %p343 = scmp.gt.s32.totalorder %s342, 0
      %s344 = scalar_select %p343, %s342, 0
      %p345 = scmp.lt.s32.totalorder %s22, 1
      %s346 = scalar_select %p345, %s22, 1
      %p347 = scmp.lt.s32.totalorder %s344, 15
      %s348 = scalar_select %p347, %s344, 15
      %s349 = smul.addr %s348, 2
      %s350 = smul.addr %s346, 32
      %s351 = sadd.s32 %s349, %s350
      %s352 = smul.addr %s351, 8
      %s353 = scalar_lea.vmem %s1, %s352
      %p354 = pneg %p89
      %p355 = pneg %p86
      %s356 = smul.u32 %s23, 4
      %s357 = sadd.s32 %s356, 4
      %p358 = scmp.lt.s32.totalorder %s357, 15
      %s359 = scalar_select %p358, %s357, 15
      %p360 = scmp.lt.s32.totalorder %s22, 1
      %s361 = scalar_select %p360, %s22, 1
      %p362 = scmp.lt.s32.totalorder %s359, 15
      %s363 = scalar_select %p362, %s359, 15
      %s364 = smul.addr %s363, 2
      %s365 = smul.addr %s361, 32
      %s366 = sadd.s32 %s364, %s365
      %s367 = smul.addr %s366, 8
      %s368 = scalar_lea.vmem %s2, %s367
      %p369 = pneg %p125
      %p370 = pneg %p122
      %p371 = pneg %p146
      %p372 = pneg %p143
      %p373 = pneg %p167
      %p374 = pneg %p164
      %p375 = pneg %p188
      %p376 = pneg %p185
      %p377 = pneg %p209
      %p378 = pneg %p206
      %p379 = pneg %p237
      %p380 = pneg %p234
      %s381 = smul.u32 4, %s23
      %p382 = scmp.lt.s32.totalorder %s22, 1
      %s383 = scalar_select %p382, %s22, 1
      %p384 = scmp.lt.s32.totalorder %s381, 15
      %s385 = scalar_select %p384, %s381, 15
      %s386 = smul.addr %s385, 2
      %s387 = smul.addr %s383, 32
      %s388 = sadd.s32 %s386, %s387
      %s389 = smul.addr %s388, 8
      %s390 = scalar_lea.vmem %s7, %s389
      %s391 = smul.u32 4, %s23
      %p392 = scmp.lt.s32.totalorder %s22, 1
      %s393 = scalar_select %p392, %s22, 1
      %p394 = scmp.lt.s32.totalorder %s391, 15
      %s395 = scalar_select %p394, %s391, 15
      %s396 = smul.addr %s395, 2
      %s397 = smul.addr %s393, 32
      %s398 = sadd.s32 %s396, %s397
      %s399 = smul.addr %s398, 8
      %s400 = scalar_lea.vmem %s0, %s399
      %s401 = smul.u32 4, %s23
      %s402 = smul.u32 %s23, 4
      %s403 = ssub.s32 %s402, 1
      %p404 = scmp.gt.s32.totalorder %s403, 0
      %s405 = scalar_select %p404, %s403, 0
      %p406 = scmp.lt.s32.totalorder %s22, 1
      %s407 = scalar_select %p406, %s22, 1
      %p408 = scmp.lt.s32.totalorder %s405, 15
      %s409 = scalar_select %p408, %s405, 15
      %s410 = smul.addr %s409, 2
      %s411 = smul.addr %s407, 32
      %s412 = sadd.s32 %s410, %s411
      %s413 = smul.addr %s412, 8
      %s414 = scalar_lea.vmem %s1, %s413
      %s415 = smul.u32 %s23, 4
      %s416 = ssub.s32 %s415, 1
      %p417 = scmp.gt.s32.totalorder %s416, 0
      %s418 = scalar_select %p417, %s416, 0
      %s419 = smul.u32 %s23, 4
      %s420 = sadd.s32 %s419, 4
      %p421 = scmp.lt.s32.totalorder %s420, 15
      %s422 = scalar_select %p421, %s420, 15
      %p423 = scmp.lt.s32.totalorder %s22, 1
      %s424 = scalar_select %p423, %s22, 1
      %p425 = scmp.lt.s32.totalorder %s422, 15
      %s426 = scalar_select %p425, %s422, 15
      %s427 = smul.addr %s426, 2
      %s428 = smul.addr %s424, 32
      %s429 = sadd.s32 %s427, %s428
      %s430 = smul.addr %s429, 8
      %s431 = scalar_lea.vmem %s2, %s430
      %s432 = smul.u32 %s23, 4
      %s433 = sadd.s32 %s432, 4
      %p434 = scmp.lt.s32.totalorder %s433, 15
      %s435 = scalar_select %p434, %s433, 15
      %s436 = smul.u32 4, %s23
      %p437 = scmp.lt.s32.totalorder %s22, 1
      %s438 = scalar_select %p437, %s22, 1
      %p439 = scmp.lt.s32.totalorder %s436, 15
      %s440 = scalar_select %p439, %s436, 15
      %s441 = smul.addr %s440, 2
      %s442 = smul.addr %s438, 32
      %s443 = sadd.s32 %s441, %s442
      %s444 = smul.addr %s443, 8
      %s445 = scalar_lea.vmem %s7, %s444
      %s446 = smul.u32 4, %s23
      %v447 = vld [vmem:[%s400] sm:$0xff]
      %v448 = vld [vmem:[%s400 + $0x8] sm:$0xff]
      %v449 = vld [vmem:[%s400 + $0x10] sm:$0xff]
      %v450 = vld [vmem:[%s400 + $0x18] sm:$0xff]
      %v451 = vld [vmem:[%s400 + $0x20] sm:$0xff]
      %v452 = vld [vmem:[%s400 + $0x28] sm:$0xff]
      %v453 = vld [vmem:[%s400 + $0x30] sm:$0xff]
      %v454 = vld [vmem:[%s400 + $0x38] sm:$0xff]
      %v455 = vld [vmem:[%s414] sm:$0xff]
      %v456 = vld [vmem:[%s414 + $0x8] sm:$0xff]
      %p457 = scmp.gt.s32.totalorder %s23, 0
      %s458 = scalar_select %p457, 1, 0
      %s459 = scvt.s32.f32 %s458
      %v460 = vstv %s459
      %v461 = vmul.f32 %v455, %v460
      %v462 = vmul.f32 %v456, %v460
      %v463 = vld [vmem:[%s431] sm:$0xff]
      %v464 = vld [vmem:[%s431 + $0x8] sm:$0xff]
      %p465 = scmp.lt.s32.totalorder %s23, 3
      %s466 = scalar_select %p465, 1, 0
      %s467 = scvt.s32.f32 %s466
      %v468 = vstv %s467
      %v469 = vmul.f32 %v463, %v468
      %v470 = vmul.f32 %v464, %v468
      %v471 = vld [vmem:[%s3] sm:$0x7]
      %v472 = vld [vmem:[%s3 + $0x4] sm:$0x7]
      %v473 = vld [vmem:[%s3 + $0x8] sm:$0x7]
      %v474 = vlaneseq
      %v475 = vshrl.u32 %v474, 7
      %v476 = vsub.s32 1, %v475
      %v477 = vrot.slane %v471, %v476
      %v478 = vmul.f32 %v461, %v477
      %v479 = vmul.f32 %v462, %v477
      %v480 = vmul.f32 %v447, %v477
      %v481 = vmul.f32 %v448, %v477
      %v482 = vmul.f32 %v449, %v477
      %v483 = vmul.f32 %v450, %v477
      %v484 = vmul.f32 %v451, %v477
      %v485 = vmul.f32 %v452, %v477
      %v486 = vlaneseq
      %v487 = vshrl.u32 %v486, 7
      %v488 = vsub.s32 1, %v487
      %v489 = vrot.slane %v472, %v488
      %v490 = vmul.f32 %v447, %v489
      %v491 = vmul.f32 %v448, %v489
      %v492 = vmul.f32 %v449, %v489
      %v493 = vmul.f32 %v450, %v489
      %v494 = vmul.f32 %v451, %v489
      %v495 = vmul.f32 %v452, %v489
      %v496 = vmul.f32 %v453, %v489
      %v497 = vmul.f32 %v454, %v489
      %v498 = vadd.f32 %v478, %v490
      %v499 = vadd.f32 %v479, %v491
      %v500 = vadd.f32 %v480, %v492
      %v501 = vadd.f32 %v481, %v493
      %v502 = vadd.f32 %v482, %v494
      %v503 = vadd.f32 %v483, %v495
      %v504 = vadd.f32 %v484, %v496
      %v505 = vadd.f32 %v485, %v497
      %v506 = vlaneseq
      %v507 = vshrl.u32 %v506, 7
      %v508 = vsub.s32 1, %v507
      %v509 = vrot.slane %v473, %v508
      %v510 = vmul.f32 %v449, %v509
      %v511 = vmul.f32 %v450, %v509
      %v512 = vmul.f32 %v451, %v509
      %v513 = vmul.f32 %v452, %v509
      %v514 = vmul.f32 %v453, %v509
      %v515 = vmul.f32 %v454, %v509
      %v516 = vmul.f32 %v469, %v509
      %v517 = vmul.f32 %v470, %v509
      %v518 = vadd.f32 %v498, %v510
      %v519 = vadd.f32 %v499, %v511
      %v520 = vadd.f32 %v500, %v512
      %v521 = vadd.f32 %v501, %v513
      %v522 = vadd.f32 %v502, %v514
      %v523 = vadd.f32 %v503, %v515
      %v524 = vadd.f32 %v504, %v516
      %v525 = vadd.f32 %v505, %v517
      %v526 = vlaneseq
      %v527 = vshrl.u32 %v526, 7
      %v528 = vsub.s32 0, %v527
      %v529 = vrot.slane %v471, %v528
      %v530 = vmul.f32 %v461, %v529
      %v531 = vmul.f32 %v462, %v529
      %v532 = vmul.f32 %v447, %v529
      %v533 = vmul.f32 %v448, %v529
      %v534 = vmul.f32 %v449, %v529
      %v535 = vmul.f32 %v450, %v529
      %v536 = vmul.f32 %v451, %v529
      %v537 = vmul.f32 %v452, %v529
      %v538 = vlaneseq
      %v539 = vshrl.u32 %v538, 7
      %v540 = vsub.s32 0, %v539
      %v541 = vrot.slane %v472, %v540
      %v542 = vmul.f32 %v447, %v541
      %v543 = vmul.f32 %v448, %v541
      %v544 = vmul.f32 %v449, %v541
      %v545 = vmul.f32 %v450, %v541
      %v546 = vmul.f32 %v451, %v541
      %v547 = vmul.f32 %v452, %v541
      %v548 = vmul.f32 %v453, %v541
      %v549 = vmul.f32 %v454, %v541
      %v550 = vadd.f32 %v530, %v542
      %v551 = vadd.f32 %v531, %v543
      %v552 = vadd.f32 %v532, %v544
      %v553 = vadd.f32 %v533, %v545
      %v554 = vadd.f32 %v534, %v546
      %v555 = vadd.f32 %v535, %v547
      %v556 = vadd.f32 %v536, %v548
      %v557 = vadd.f32 %v537, %v549
      %v558 = vlaneseq
      %v559 = vshrl.u32 %v558, 7
      %v560 = vsub.s32 0, %v559
      %v561 = vrot.slane %v473, %v560
      %v562 = vmul.f32 %v449, %v561
      %v563 = vmul.f32 %v450, %v561
      %v564 = vmul.f32 %v451, %v561
      %v565 = vmul.f32 %v452, %v561
      %v566 = vmul.f32 %v453, %v561
      %v567 = vmul.f32 %v454, %v561
      %v568 = vmul.f32 %v469, %v561
      %v569 = vmul.f32 %v470, %v561
      %v570 = vadd.f32 %v550, %v562
      %v571 = vadd.f32 %v551, %v563
      %v572 = vadd.f32 %v552, %v564
      %v573 = vadd.f32 %v553, %v565
      %v574 = vadd.f32 %v554, %v566
      %v575 = vadd.f32 %v555, %v567
      %v576 = vadd.f32 %v556, %v568
      %v577 = vadd.f32 %v557, %v569
      %v578 = vlaneseq
      %v579 = vshrl.u32 %v578, 7
      %v580 = vsub.s32 2, %v579
      %v581 = vrot.slane %v471, %v580
      %v582 = vmul.f32 %v461, %v581
      %v583 = vmul.f32 %v462, %v581
      %v584 = vmul.f32 %v447, %v581
      %v585 = vmul.f32 %v448, %v581
      %v586 = vmul.f32 %v449, %v581
      %v587 = vmul.f32 %v450, %v581
      %v588 = vmul.f32 %v451, %v581
      %v589 = vmul.f32 %v452, %v581
      %v590 = vlaneseq
      %v591 = vshrl.u32 %v590, 7
      %v592 = vsub.s32 2, %v591
      %v593 = vrot.slane %v472, %v592
      %v594 = vmul.f32 %v447, %v593
      %v595 = vmul.f32 %v448, %v593
      %v596 = vmul.f32 %v449, %v593
      %v597 = vmul.f32 %v450, %v593
      %v598 = vmul.f32 %v451, %v593
      %v599 = vmul.f32 %v452, %v593
      %v600 = vmul.f32 %v453, %v593
      %v601 = vmul.f32 %v454, %v593
      %v602 = vadd.f32 %v582, %v594
      %v603 = vadd.f32 %v583, %v595
      %v604 = vadd.f32 %v584, %v596
      %v605 = vadd.f32 %v585, %v597
      %v606 = vadd.f32 %v586, %v598
      %v607 = vadd.f32 %v587, %v599
      %v608 = vadd.f32 %v588, %v600
      %v609 = vadd.f32 %v589, %v601
      %v610 = vlaneseq
      %v611 = vshrl.u32 %v610, 7
      %v612 = vsub.s32 2, %v611
      %v613 = vrot.slane %v473, %v612
      %v614 = vmul.f32 %v449, %v613
      %v615 = vmul.f32 %v450, %v613
      %v616 = vmul.f32 %v451, %v613
      %v617 = vmul.f32 %v452, %v613
      %v618 = vmul.f32 %v453, %v613
      %v619 = vmul.f32 %v454, %v613
      %v620 = vmul.f32 %v469, %v613
      %v621 = vmul.f32 %v470, %v613
      %v622 = vadd.f32 %v602, %v614
      %v623 = vadd.f32 %v603, %v615
      %v624 = vadd.f32 %v604, %v616
      %v625 = vadd.f32 %v605, %v617
      %v626 = vadd.f32 %v606, %v618
      %v627 = vadd.f32 %v607, %v619
      %v628 = vadd.f32 %v608, %v620
      %v629 = vadd.f32 %v609, %v621
      %vm638 = vcmask 1040384
      %v639 = vrot.slane %v570, 7
      %v640 = vrot.slane %v571, 7
      %v641 = vsel %vm638, %v639, %v640
      %v642 = vrot.slane %v572, 7
      %v643 = vrot.slane %v573, 7
      %v644 = vsel %vm638, %v642, %v643
      %v645 = vrot.slane %v574, 7
      %v646 = vrot.slane %v575, 7
      %v647 = vsel %vm638, %v645, %v646
      %v648 = vrot.slane %v576, 7
      %v649 = vrot.slane %v577, 7
      %v650 = vsel %vm638, %v648, %v649
      %v659 = vsel %vm638, 0.0, %v639
      %v660 = vsel %vm638, 0.0, %v642
      %v661 = vsel %vm638, 0.0, %v645
      %v662 = vsel %vm638, 0.0, %v648
      %v663 = vadd.f32 %v518, %v659
      %v664 = vadd.f32 %v519, %v641
      %v665 = vadd.f32 %v520, %v660
      %v666 = vadd.f32 %v521, %v644
      %v667 = vadd.f32 %v522, %v661
      %v668 = vadd.f32 %v523, %v647
      %v669 = vadd.f32 %v524, %v662
      %v670 = vadd.f32 %v525, %v650
      %vm679 = vcmask 1046528
      %v680 = vrot.slane %v622, 1
      %v681 = vrot.slane %v623, 1
      %v682 = vsel %vm679, %v680, %v681
      %v683 = vrot.slane %v624, 1
      %v684 = vrot.slane %v625, 1
      %v685 = vsel %vm679, %v683, %v684
      %v686 = vrot.slane %v626, 1
      %v687 = vrot.slane %v627, 1
      %v688 = vsel %vm679, %v686, %v687
      %v689 = vrot.slane %v628, 1
      %v690 = vrot.slane %v629, 1
      %v691 = vsel %vm679, %v689, %v690
      %v700 = vsel %vm679, %v681, 0.0
      %v701 = vsel %vm679, %v684, 0.0
      %v702 = vsel %vm679, %v687, 0.0
      %v703 = vsel %vm679, %v690, 0.0
      %v704 = vadd.f32 %v663, %v682
      %v705 = vadd.f32 %v664, %v700
      %v706 = vadd.f32 %v665, %v685
      %v707 = vadd.f32 %v666, %v701
      %v708 = vadd.f32 %v667, %v688
      %v709 = vadd.f32 %v668, %v702
      %v710 = vadd.f32 %v669, %v691
      %v711 = vadd.f32 %v670, %v703
      %v712 = vld [vmem:[%s4] sm:$0x1]
      %v714 = vlaneseq
      %v715 = vshrl.u32 %v714, 7
      %v716 = vsub.s32 0, %v715
      %v717 = vrot.slane %v712, %v716
      %v719 = vadd.f32 %v704, %v717
      %v720 = vadd.f32 %v705, %v717
      %v721 = vadd.f32 %v706, %v717
      %v722 = vadd.f32 %v707, %v717
      %v723 = vadd.f32 %v708, %v717
      %v724 = vadd.f32 %v709, %v717
      %v725 = vadd.f32 %v710, %v717
      %v726 = vadd.f32 %v711, %v717
      %v727 = vmax.f32 %v719, 0.0
      %v728 = vmax.f32 %v720, 0.0
      %v729 = vmax.f32 %v721, 0.0
      %v730 = vmax.f32 %v722, 0.0
      %v731 = vmax.f32 %v723, 0.0
      %v732 = vmax.f32 %v724, 0.0
      %v733 = vmax.f32 %v725, 0.0
      %v734 = vmax.f32 %v726, 0.0
      %v735 = vld [vmem:[%s5] sm:$0xf]
      %v736 = vld [vmem:[%s6] sm:$0x1]
      %v738 = vlaneseq
      %v739 = vshrl.u32 %v738, 7
      %v740 = vsub.s32 0, %v739
      %v741 = vrot.slane %v736, %v740
      %vm743 = vcmask 31744
      %v745 = vsel %vm743, %v727, 0
      %v748 = vsel %vm743, %v728, 0
      %v751 = vsel %vm743, %v729, 0
      %v754 = vsel %vm743, %v730, 0
      %v757 = vsel %vm743, %v731, 0
      %v760 = vsel %vm743, %v732, 0
      %v763 = vsel %vm743, %v733, 0
      %v766 = vsel %vm743, %v734, 0
      %vm768 = vcmask 1043456
      %v770 = vsel %vm768, %v735, 0
      %772 = vmatprep.subr.mxu0 0.0
      %773 = vmatpush1.msra.mxu0 %v770
      %774 = vmatprep.subr.mxu0 0.0
      %775 = vmatpush1.msra.mxu0 0.0
      %776 = vmatprep.subr.mxu0 0.0
      %777 = vmatpush1.msra.mxu0 0.0
      %778 = vmatprep.subr.mxu0 0.0
      %779 = vmatpush1.msra.mxu0 0.0
      %780 = vmatprep.subr.mxu0 0.0
      %781 = vmatpush1.msra.mxu0 0.0
      %782 = vmatprep.subr.mxu0 0.0
      %783 = vmatpush1.msra.mxu0 0.0
      %784 = vmatprep.subr.mxu0 0.0
      %785 = vmatpush1.msra.mxu0 0.0
      %786 = vmatprep.subr.mxu0 0.0
      %787 = vmatpush1.msra.mxu0 0.0
      %788 = vmatprep.subr.mxu0 0.0
      %789 = vmatpush1.msra.mxu0 0.0
      %790 = vmatprep.subr.mxu0 0.0
      %791 = vmatpush1.msra.mxu0 0.0
      %792 = vmatprep.subr.mxu0 0.0
      %793 = vmatpush1.msra.mxu0 0.0
      %794 = vmatprep.subr.mxu0 0.0
      %795 = vmatpush1.msra.mxu0 0.0
      %796 = vmatprep.subr.mxu0 0.0
      %797 = vmatpush1.msra.mxu0 0.0
      %798 = vmatprep.subr.mxu0 0.0
      %799 = vmatpush1.msra.mxu0 0.0
      %800 = vmatprep.subr.mxu0 0.0
      %801 = vmatpush1.msra.mxu0 0.0
      %802 = vmatprep.subr.mxu0 0.0
      %803 = vmatpush1.msra.mxu0 0.0
      %804 = vmatprep.subr.mxu0 0.0
      %805 = vmatpush1.msra.mxu0 0.0
      %806 = vmatprep.subr.mxu0 0.0
      %807 = vmatpush1.msra.mxu0 0.0
      %808 = vmatprep.subr.mxu0 0.0
      %809 = vmatpush1.msra.mxu0 0.0
      %810 = vmatprep.subr.mxu0 0.0
      %811 = vmatpush1.msra.mxu0 0.0
      %812 = vmatprep.subr.mxu0 0.0
      %813 = vmatpush1.msra.mxu0 0.0
      %814 = vmatprep.subr.mxu0 0.0
      %815 = vmatpush1.msra.mxu0 0.0
      %816 = vmatprep.subr.mxu0 0.0
      %817 = vmatpush1.msra.mxu0 0.0
      %818 = vmatprep.subr.mxu0 0.0
      %819 = vmatpush1.msra.mxu0 0.0
      %820 = vmatprep.subr.mxu0 0.0
      %821 = vmatpush1.msra.mxu0 0.0
      %822 = vmatprep.subr.mxu0 0.0
      %823 = vmatpush1.msra.mxu0 0.0
      %824 = vmatprep.subr.mxu0 0.0
      %825 = vmatpush1.msra.mxu0 0.0
      %826 = vmatprep.subr.mxu0 0.0
      %827 = vmatpush1.msra.mxu0 0.0
      %828 = vmatprep.subr.mxu0 0.0
      %829 = vmatpush1.msra.mxu0 0.0
      %830 = vmatprep.subr.mxu0 0.0
      %831 = vmatpush1.msra.mxu0 0.0
      %832 = vmatprep.subr.mxu0 0.0
      %833 = vmatpush1.msra.mxu0 0.0
      %834 = vmatprep.subr.mxu0 0.0
      %835 = vmatpush1.msra.mxu0 0.0
      %836 = vmatprep.mubr.f32.mxu0 0.0
      %837 = vmatmul.mubr.f32.gmra.mrb[0].mxu0 %v745
      %v838 = vpop.f32.mrb[0].mxu0
      %v839 = vadd.f32 %v741, %v838
      %v840 = vpop.f32.mrb[0].mxu0
      %841 = vmatprep.mubr.f32.mxu0 0.0
      %842 = vmatmul.mubr.f32.gmra.mrb[0].mxu0 %v748
      %v843 = vpop.f32.mrb[0].mxu0
      %v844 = vadd.f32 %v741, %v843
      %v845 = vpop.f32.mrb[0].mxu0
      %846 = vmatprep.mubr.f32.mxu0 0.0
      %847 = vmatmul.mubr.f32.gmra.mrb[0].mxu0 %v751
      %v848 = vpop.f32.mrb[0].mxu0
      %v849 = vadd.f32 %v741, %v848
      %v850 = vpop.f32.mrb[0].mxu0
      %851 = vmatprep.mubr.f32.mxu0 0.0
      %852 = vmatmul.mubr.f32.gmra.mrb[0].mxu0 %v754
      %v853 = vpop.f32.mrb[0].mxu0
      %v854 = vadd.f32 %v741, %v853
      %v855 = vpop.f32.mrb[0].mxu0
      %856 = vmatprep.mubr.f32.mxu0 0.0
      %857 = vmatmul.mubr.f32.gmra.mrb[0].mxu0 %v757
      %v858 = vpop.f32.mrb[0].mxu0
      %v859 = vadd.f32 %v741, %v858
      %v860 = vpop.f32.mrb[0].mxu0
      %861 = vmatprep.mubr.f32.mxu0 0.0
      %862 = vmatmul.mubr.f32.gmra.mrb[0].mxu0 %v760
      %v863 = vpop.f32.mrb[0].mxu0
      %v864 = vadd.f32 %v741, %v863
      %v865 = vpop.f32.mrb[0].mxu0
      %866 = vmatprep.mubr.f32.mxu0 0.0
      %867 = vmatmul.mubr.f32.gmra.mrb[0].mxu0 %v763
      %v868 = vpop.f32.mrb[0].mxu0
      %v869 = vadd.f32 %v741, %v868
      %v870 = vpop.f32.mrb[0].mxu0
      %871 = vmatprep.mubr.f32.mxu0 0.0
      %872 = vmatmul.mubr.f32.gmra.mrb[0].mxu0 %v766
      %v873 = vpop.f32.mrb[0].mxu0
      %v874 = vadd.f32 %v741, %v873
      %v875 = vpop.f32.mrb[0].mxu0
      %876 = vdwg.mxu0
      %v877 = vmax.f32 %v839, 0.0
      %v878 = vmax.f32 %v844, 0.0
      %v879 = vmax.f32 %v849, 0.0
      %v880 = vmax.f32 %v854, 0.0
      %v881 = vmax.f32 %v859, 0.0
      %v882 = vmax.f32 %v864, 0.0
      %v883 = vmax.f32 %v869, 0.0
      %v884 = vmax.f32 %v874, 0.0
      %vm885 = vcmask 64512
      %886 = vst.msk [vmem:[%s445] sm:$0xff] %vm885, %v877
      %887 = vst.msk [vmem:[%s445 + $0x8] sm:$0xff] %vm885, %v878
      %888 = vst.msk [vmem:[%s445 + $0x10] sm:$0xff] %vm885, %v879
      %889 = vst.msk [vmem:[%s445 + $0x18] sm:$0xff] %vm885, %v880
      %890 = vst.msk [vmem:[%s445 + $0x20] sm:$0xff] %vm885, %v881
      %891 = vst.msk [vmem:[%s445 + $0x28] sm:$0xff] %vm885, %v882
      %892 = vst.msk [vmem:[%s445 + $0x30] sm:$0xff] %vm885, %v883
      %893 = vst.msk [vmem:[%s445 + $0x38] sm:$0xff] %vm885, %v884
      %s894 = smul.u32 4, %s23
      %p895 = scmp.lt.s32.totalorder %s22, 1
      %s896 = scalar_select %p895, %s22, 1
      %p897 = scmp.lt.s32.totalorder %s894, 15
      %s898 = scalar_select %p897, %s894, 15
      %s899 = smul.addr %s898, 2
      %s900 = smul.addr %s896, 32
      %s901 = sadd.s32 %s899, %s900
      %s902 = smul.addr %s901, 8
      %s903 = scalar_lea.vmem %s7, %s902
      // Predicated region
      $region49: #{tpu_custom_call.1} parent=47 // pred_check
        %p904 = pneg %p234
      $region50: #{tpu_custom_call.1} parent=47 // pred_check_branch
        %906 = sbr.rel (%p904) target = $region52
      $region51: #{tpu_custom_call.1} parent=47 // pred_region
        %s907 = smul.u32 4, %s23
      $region52: #{tpu_custom_call.1} parent=47 // pred_fallthru
        _
    $region48: #{tpu_custom_call.1} parent=5 // pred_fallthru
      _
    %p908 = scmp.le.s32.totalorder 2, %s13
    // Predicated region
    $region53: #{tpu_custom_call.1} parent=5 // pred_check
      %p909 = pneg %p908
    $region54: #{tpu_custom_call.1} parent=5 // pred_check_branch
      %911 = sbr.rel (%p909) target = $region56
    $region55: #{tpu_custom_call.1} parent=5 // pred_region
      %s912 = ssub.s32 %s13, 2
      // Predicated region
      $region57: #{tpu_custom_call.1} parent=55 // pred_check
        %p913 = pneg %p240
      $region58: #{tpu_custom_call.1} parent=55 // pred_check_branch
        %915 = sbr.rel (%p913) target = $region60
      $region59: #{tpu_custom_call.1} parent=55 // pred_region
        %s916 = smul.u32 4, %s25
        %p917 = scmp.lt.s32.totalorder %s24, 1
        %s918 = scalar_select %p917, %s24, 1
        %p919 = scmp.lt.s32.totalorder %s916, 15
        %s920 = scalar_select %p919, %s916, 15
        %s921 = smul.addr %s920, 2
        %s922 = smul.addr %s918, 32
        %s923 = sadd.s32 %s921, %s922
        %s924 = smul.addr %s923, 8
        %s925 = scalar_lea.vmem %s7, %s924
      $region60: #{tpu_custom_call.1} parent=55 // pred_fallthru
        _
    $region56: #{tpu_custom_call.1} parent=5 // pred_fallthru
      _
  $region6: #{tpu_custom_call.1} parent=0 // loop_footer
    %s17 = sadd.s32 1, %s13
  $region7: #{tpu_custom_call.1} parent=0 // loop_footer_branch
    %12 = sbr.rel target = $region3
  $region8: #{tpu_custom_call.1} parent=0 // loop_exit
    _

</llo_original>
